<compile_context>
chip_gen: v7x
topology: tpu7x:2x2x1
jax: 0.10.0
libtpu: 0.0.40
codegen_flags: <defaults>
</compile_context>

<pallas_src>
import functools
import math

import jax
import jax.numpy as jnp
from jax.experimental import pallas as pl
from jax.experimental.pallas import tpu as pltpu


def _rmsnorm_kernel(x_ref, w_ref, o_ref, *, eps, keep_f32_norm):
    # x_ref: (tile_rows, dim), w_ref: (1, dim), o_ref: (tile_rows, dim).
    # Rows are fully independent -> the ragged last grid block may read
    # uninitialized rows (no host-side padding); their stores are masked by
    # Pallas.  Keep all math strictly per-row (no cross-row ops).
    x = x_ref[...]
    xf = x.astype(jnp.float32)                                  # x.float()
    ms = jnp.mean(xf * xf, axis=-1, keepdims=True)              # mean(x^2, -1)
    scaled = xf * jax.lax.rsqrt(ms + eps)                       # _norm(...)
    if keep_f32_norm:
        # Optional (flag): keep f32 through the weight multiply; skips the
        # f32 -> x.dtype round trip (minor VALU relief on v5e) but rounds
        # slightly differently from torch's `.type_as(x)`.
        o_ref[...] = (scaled * w_ref[...].astype(jnp.float32)).astype(o_ref.dtype)
    else:
        normed = scaled.astype(x.dtype)                         # .type_as(x)
        o_ref[...] = (normed * w_ref[...]).astype(o_ref.dtype)  # * weight


def _sublane_multiple(dtype) -> int:
    # Sublane packing of a vreg row: f32 -> 8, bf16 -> 16, int8/fp8 -> 32.
    return max(8, 32 // jnp.dtype(dtype).itemsize)


def _physical_vmem_bytes() -> int:
    try:
        cap = int(pltpu.get_tpu_info().vmem_capacity_bytes)
    except Exception:
        cap = 64 * 1024 * 1024  # conservative default (v7x: 64 MiB / core)
    return min(max(cap, 32 * 1024 * 1024), 128 * 1024 * 1024)


def _cores_per_chip() -> int:
    # v7x exposes 2 TensorCores to one Pallas program; v5e/v6e expose 1.
    try:
        kind = jax.devices()[0].device_kind.lower()
    except Exception:
        return 1
    if "tpu7" in kind or "v7" in kind:
        return 2
    return 1


def _dimension_semantics_candidates(num_cores):
    cands = []
    if num_cores >= 2:
        core_par = getattr(pltpu, "CORE_PARALLEL", None)
        if core_par is not None:
            cands.append((core_par,))          # actually splits steps across TCs
    cands.append(("parallel",))                # safe default / fallback
    return cands


def _choose_tile_rows(rows: int, dim: int, in_dtype, out_dtype, num_cores: int) -> int:
    """Largest sublane-aligned row tile whose working set fits the VMEM budget.

    Working set per row = double-buffered input + output tiles plus ~one f32
    intermediate tile (the compiler keeps the f32 copy live across the
    mean-of-squares reduce).
    """
    sub = _sublane_multiple(in_dtype)
    bytes_in = jnp.dtype(in_dtype).itemsize
    bytes_out = jnp.dtype(out_dtype).itemsize
    phys = _physical_vmem_bytes()
    small_vmem = phys <= (64 << 20)
    # ~1/2 of physical VMEM on 64 MiB chips (v7x), ~5/8 on 128 MiB chips.
    budget = phys // 2 if small_vmem else (phys * 5) // 8
    per_row = dim * (2 * (bytes_in + bytes_out) + 4)   # dbuf in+out, + f32 temp
    tile = budget // max(per_row, 1)
    # 512-row cap on 64 MiB VMEM (measured ~85% of HBM roofline already at
    # 512); the 1024-row cap is a 128 MiB (v5e/v6e) number.
    tile = min(tile, 512 if small_vmem else 1024)
    rows_up = -(-rows // sub) * sub                    # rows up to sublane multiple
    tile = min(tile, rows_up)
    tile = max((tile // sub) * sub, sub)               # sublane-aligned
    # Keep enough grid steps so the software pipeline stays alive and, on
    # 2-TC chips, both cores get several steps each (imbalance <= 1/8).
    min_steps = 8 if num_cores >= 2 else 4
    if rows_up >= min_steps * sub and pl.cdiv(rows, tile) < min_steps:
        tile = max(((rows_up // min_steps) // sub) * sub, sub)
    return int(tile)


def rmsnorm(x, weight, eps: float = 1e-6, tile_rows: int | None = None,
            out_dtype=None, keep_f32_norm: bool = False):
    """RMSNorm over the last axis of x; weight has shape (dim,).

    out_dtype: defaults to PyTorch promotion semantics
      (normed.type_as(x) * weight).  Pass x.dtype explicitly to halve the
      write stream for bf16 activations with an f32 weight (changes dtype
      semantics vs. the PyTorch module, so it is opt-in).
    """
    orig_shape = x.shape
    dim = orig_shape[-1]
    rows = math.prod(orig_shape[:-1])
    x2d = x.reshape(rows, dim)

    if out_dtype is None:
        out_dtype = jnp.promote_types(x.dtype, weight.dtype)

    num_cores = _cores_per_chip()
    if tile_rows is None:
        tile_rows = _choose_tile_rows(rows, dim, x.dtype, out_dtype, num_cores)

    # Ragged grid: no host-side pad, no output slice.  Pallas masks the edge
    # block's stores; its reads may be garbage but rows are independent.
    grid = (pl.cdiv(rows, tile_rows),)

    # Scoped VMEM limit sized to the double-buffered in+out tiles plus the
    # f32 intermediate tile (+ weight + slack), capped below physical VMEM.
    bytes_in = jnp.dtype(x.dtype).itemsize
    bytes_out = jnp.dtype(out_dtype).itemsize
    tile_vmem = tile_rows * dim * (2 * (bytes_in + bytes_out) + 4)
    weight_vmem = 2 * dim * jnp.dtype(weight.dtype).itemsize
    vmem_limit = min(_physical_vmem_bytes() - (8 << 20),
                     tile_vmem + weight_vmem + (8 << 20))
    vmem_limit = int(max(vmem_limit, 16 << 20))

    # (1, dim) weight block with a constant index map -> VMEM-resident, never
    # re-DMA'd per grid step, clean (sublane, lane) broadcast.
    w2d = weight.reshape(1, dim)

    kernel = functools.partial(_rmsnorm_kernel, eps=eps,
                               keep_f32_norm=keep_f32_norm)

    def _build(dim_sem):
        return pl.pallas_call(
            kernel,
            out_shape=jax.ShapeDtypeStruct((rows, dim), out_dtype),
            grid_spec=pltpu.PrefetchScalarGridSpec(
                num_scalar_prefetch=0,
                grid=grid,
                in_specs=[
                    pl.BlockSpec((tile_rows, dim), lambda i: (i, 0)),
                    pl.BlockSpec((1, dim), lambda i: (0, 0)),
                ],
                out_specs=pl.BlockSpec((tile_rows, dim), lambda i: (i, 0)),
            ),
            compiler_params=pltpu.CompilerParams(
                dimension_semantics=dim_sem,
                vmem_limit_bytes=vmem_limit,
            ),
        )

    out2d = None
    last_err = None
    for dim_sem in _dimension_semantics_candidates(num_cores):
        try:
            out2d = _build(dim_sem)(x2d, w2d)
            break
        except Exception as e:  # e.g. CORE_PARALLEL unsupported -> fall back
            last_err = e
            out2d = None
    if out2d is None:
        raise last_err

    return out2d.reshape(orig_shape)


def _reference(x, weight, eps):
    xf = x.astype(jnp.float32)
    normed = (xf * jax.lax.rsqrt(jnp.mean(xf * xf, axis=-1, keepdims=True) + eps)
              ).astype(x.dtype)
    return normed * weight


if __name__ == "__main__":
    key = jax.random.PRNGKey(0)
    k0, k1, k2 = jax.random.split(key, 3)

    # 1) Small shapes consistent with the module: (batch, seq, hidden).
    batch, seq, hidden = 2, 8, 32
    x = jax.random.normal(k0, (batch, seq, hidden), dtype=jnp.float32)
    weight = jnp.ones((hidden,), dtype=jnp.float32)   # nn.Parameter(torch.ones(dim))

    out = rmsnorm(x, weight, eps=1e-6)
    jax.block_until_ready(out)
    ref = _reference(x, weight, 1e-6)
    assert out.shape == x.shape and out.dtype == ref.dtype
    assert jnp.allclose(out, ref, atol=1e-5, rtol=1e-5)

    # 2) bf16 activations, rows not divisible by the sublane/tile multiple and
    # a lane-dense hidden dim -> exercises the ragged (masked) edge block and
    # the promoted-output path.  No pad / slice is performed around the call.
    xb = jax.random.normal(k1, (3, 5, 256), dtype=jnp.bfloat16)
    wb = jnp.ones((256,), dtype=jnp.float32)
    outb = rmsnorm(xb, wb, eps=1e-6)
    jax.block_until_ready(outb)
    refb = _reference(xb, wb, 1e-6)
    assert outb.shape == xb.shape and outb.dtype == refb.dtype
    assert jnp.allclose(outb.astype(jnp.float32), refb.astype(jnp.float32),
                        atol=2e-2, rtol=2e-2)

    # 3) Multi-step ragged grid: rows=100 with a forced 16-row tile -> 7 grid
    # steps, last block masked (4 valid rows out of 16).
    xc = jax.random.normal(k2, (2, 50, 128), dtype=jnp.float32)
    wc = jax.random.normal(jax.random.PRNGKey(7), (128,), dtype=jnp.float32)
    outc = rmsnorm(xc, wc, eps=1e-6, tile_rows=16)
    jax.block_until_ready(outc)
    refc = _reference(xc, wc, 1e-6)
    assert outc.shape == xc.shape and outc.dtype == refc.dtype
    assert jnp.allclose(outc, refc, atol=1e-5, rtol=1e-5)

    print("KERNEL_OK")
</pallas_src>

<mosaic_0001>
module attributes {stable_mosaic.version = 11 : i64} {
  func.func @_rmsnorm_kernel(%arg0: i32, %arg1: memref<16x32xf32, #tpu.memory_space<vmem>>, %arg2: memref<1x32xf32, #tpu.memory_space<vmem>>, %arg3: memref<16x32xf32, #tpu.memory_space<vmem>>) attributes {dimension_semantics = [#tpu.dimension_semantics<parallel>], iteration_bounds = array<i64: 1>, scalar_prefetch = 0 : i64, scratch_operands = 0 : i64, tpu.core_type = #tpu.core_type<tc>, window_params = [{transform_indices = @transform_0, window_bounds = array<i64: 16, 32>}, {pipeline_mode = #tpu.pipeline_mode<synchronous>, transform_indices = @transform_1, window_bounds = array<i64: 1, 32>}, {transform_indices = @transform_2, window_bounds = array<i64: 16, 32>}]} {
    %c0 = arith.constant 0 : index
    %c0_0 = arith.constant 0 : index
    %0 = vector.load %arg1[%c0, %c0_0] : memref<16x32xf32, #tpu.memory_space<vmem>>, vector<16x32xf32>
    %1 = arith.mulf %0, %0 : vector<16x32xf32>
    %cst = arith.constant dense<0.000000e+00> : vector<16xf32>
    %2 = vector.multi_reduction <add>, %1, %cst [1] : vector<16x32xf32> to vector<16xf32>
    %3 = vector.shape_cast %2 : vector<16xf32> to vector<16x1xf32>
    %cst_1 = arith.constant 3.200000e+01 : f32
    %4 = vector.broadcast %cst_1 : f32 to vector<16x1xf32>
    %5 = arith.divf %3, %4 : vector<16x1xf32>
    %cst_2 = arith.constant 9.99999997E-7 : f32
    %6 = vector.broadcast %cst_2 : f32 to vector<16x1xf32>
    %7 = arith.addf %5, %6 : vector<16x1xf32>
    %8 = math.rsqrt %7 : vector<16x1xf32>
    %9 = vector.broadcast %8 : vector<16x1xf32> to vector<16x32xf32>
    %10 = arith.mulf %0, %9 : vector<16x32xf32>
    %c0_3 = arith.constant 0 : index
    %c0_4 = arith.constant 0 : index
    %11 = vector.load %arg2[%c0_3, %c0_4] : memref<1x32xf32, #tpu.memory_space<vmem>>, vector<1x32xf32>
    %12 = vector.broadcast %11 : vector<1x32xf32> to vector<16x32xf32>
    %13 = arith.mulf %10, %12 : vector<16x32xf32>
    %c0_5 = arith.constant 0 : index
    %c0_6 = arith.constant 0 : index
    %14 = vector.load %arg3[%c0_5, %c0_6] : memref<16x32xf32, #tpu.memory_space<vmem>>, vector<16x32xf32>
    tpu.vector_store %arg3[%c0_5, %c0_6], %13 {strides = array<i32>} : memref<16x32xf32, #tpu.memory_space<vmem>>, vector<16x32xf32>,
    return
  }
  func.func @transform_0(%arg0: i32) -> (i32, i32) {
    %c0_i32 = arith.constant 0 : i32
    %c0_i32_0 = arith.constant 0 : i32
    return %arg0, %c0_i32 : i32, i32
  }
  func.func @transform_1(%arg0: i32) -> (i32, i32) {
    %c0_i32 = arith.constant 0 : i32
    %c0_i32_0 = arith.constant 0 : i32
    %c0_i32_1 = arith.constant 0 : i32
    return %c0_i32, %c0_i32_0 : i32, i32
  }
  func.func @transform_2(%arg0: i32) -> (i32, i32) {
    %c0_i32 = arith.constant 0 : i32
    %c0_i32_0 = arith.constant 0 : i32
    return %arg0, %c0_i32 : i32, i32
  }
}

</mosaic_0001>

<llo_original>
// kernel: tpu_custom_call.1
$region0: #{tpu_custom_call.1}
  #allocation0 [shape = 'u32[]', space=smem, size = 0x4, offset = 0x4, fixed_abs, tag = 'smem constant byte address 0x4 - core index']
  #allocation1 [shape = 'u32[144,128]{1,0:T(1,128)}', space=vmem, size = 0x12000, scoped, tag = 'internal scratch']
  %s0 = inlined_call_operand.hbm [shape: f32[16,32], index: 0, kind: input, shape index: {}]
  %s1 = inlined_call_operand.vmem [shape: f32[1,32], index: 1, kind: input, shape index: {}]
  %s2 = inlined_call_operand.hbm [shape: f32[16,32], index: 2, kind: output, shape index: {}]
  %s3 = sld [smem:[#allocation0]]
  $region22: #{tpu_custom_call.1} parent=0
    _
  %s5 = ssub.s32 1, %s3
  %s6 = scalar_select 0, %s5, %s3
  $region1: #{tpu_custom_call.1} parent=0
    #allocation2 [shape = 'u8[8192]{0}', space=vmem, size = 0x2000, scoped, tag = 'input window, operand 0, single buffered']
    #allocation3 [shape = 's32[1]{0}', space=sflag, size = 0x4, scoped, tag = 'scoped memory for tpu_custom_call.1']
    #allocation4 [shape = 's32[1]{0}', space=sflag, size = 0x4, scoped, tag = 'scoped memory for tpu_custom_call.1']
    #allocation5 [shape = 'u8[8192]{0}', space=vmem, size = 0x2000, scoped, tag = 'output window, operand 0, single buffered']
    %7 = vsyncpa [#allocation3], 0
    %8 = vsyncpa [#allocation4], 0
    // Predicated region
    $region2: #{tpu_custom_call.1} parent=1 // pred_check
      _
    $region3: #{tpu_custom_call.1} parent=1 // pred_check_branch
      %10 = sbr.rel (0) target = $region5
    $region4: #{tpu_custom_call.1} parent=1 // pred_region
      %s12 = ssub.s32 256, 256
      %13 = vsyncadd [#allocation3], %s12
      %s14 = sshll.u32 [#allocation2], 4
      %s15 = int_to_ptr.vmem [resolvable:$true] %s14
      %20 = dma.hbm_to_vmem [thread:$0]  %s0, 256, %s15, [#allocation3], 128, 128, 8
    $region5: #{tpu_custom_call.1} parent=1 // pred_fallthru
      _
    // Predicated region
    $region6: #{tpu_custom_call.1} parent=1 // pred_check
      _
    $region7: #{tpu_custom_call.1} parent=1 // pred_check_branch
      %22 = sbr.rel (0) target = $region9
    $region8: #{tpu_custom_call.1} parent=1 // pred_region
      _
    $region9: #{tpu_custom_call.1} parent=1 // pred_fallthru
      _
    // Predicated region
    $region10: #{tpu_custom_call.1} parent=1 // pred_check
      _
    $region11: #{tpu_custom_call.1} parent=1 // pred_check_branch
      %24 = sbr.rel (0) target = $region13
    $region12: #{tpu_custom_call.1} parent=1 // pred_region
      %25 = dma.done [#allocation3], 256
    $region13: #{tpu_custom_call.1} parent=1 // pred_fallthru
      _
    %v26 = vld [vmem:[#allocation2] sm:$0xff]
    %v27 = vld [vmem:[#allocation2 + $0x8] sm:$0xff]
    %v28 = vmul.f32 %v26, %v26
    %v29 = vmul.f32 %v27, %v27
    %vm30 = vcmask 261120
    %v31 = vsel %vm30, %v28, 0.0
    %32 = vadd.xlane.f32.xlu0 %v31
    %v33 = vpop.xlane.xlu0 %32
    %v34 = vsel %vm30, %v29, 0.0
    %35 = vadd.xlane.f32.xlu0 %v34
    %v36 = vpop.xlane.xlu0 %35
    %v37 = vrcp.pop 32.0
    %v38 = vmul.f32 %v33, %v37
    %v39 = vmul.f32 %v36, %v37
    %v40 = vadd.f32 %v38, 1e-06
    %v41 = vadd.f32 %v39, 1e-06
    %v42 = vrsqrt.pop %v40
    %v43 = vrsqrt.pop %v41
    %v44 = vmul.f32 %v26, %v42
    %v45 = vmul.f32 %v27, %v43
    %v46 = vld [vmem:[%s1] sm:$0x1]
    %v48 = vlaneseq
    %v49 = vshrl.u32 %v48, 7
    %v50 = vsub.s32 0, %v49
    %v51 = vrot.slane %v46, %v50
    %v53 = vmul.f32 %v44, %v51
    %v54 = vmul.f32 %v45, %v51
    %55 = vst.msk [vmem:[#allocation5] sm:$0xff] %vm30, %v53
    %56 = vst.msk [vmem:[#allocation5 + $0x8] sm:$0xff] %vm30, %v54
    // Predicated region
    $region14: #{tpu_custom_call.1} parent=1 // pred_check
      _
    $region15: #{tpu_custom_call.1} parent=1 // pred_check_branch
      %58 = sbr.rel (0) target = $region17
    $region16: #{tpu_custom_call.1} parent=1 // pred_region
      %s60 = ssub.s32 256, 256
      %61 = vsyncadd [#allocation4], %s60
      %s62 = sshll.u32 [#allocation5], 4
      %s63 = int_to_ptr.vmem [resolvable:$true] %s62
      %68 = dma.vmem_to_hbm [thread:$0]  %s63, 256, %s2, [#allocation4], 128, 128, 8
    $region17: #{tpu_custom_call.1} parent=1 // pred_fallthru
      _
    // Predicated region
    $region18: #{tpu_custom_call.1} parent=1 // pred_check
      _
    $region19: #{tpu_custom_call.1} parent=1 // pred_check_branch
      %70 = sbr.rel (0) target = $region21
    $region20: #{tpu_custom_call.1} parent=1 // pred_region
      %71 = dma.done [#allocation4], 256
    $region21: #{tpu_custom_call.1} parent=1 // pred_fallthru
      _
    %72 = vsyncpa [#allocation3], 1
    %73 = vsyncpa [#allocation4], 1

</llo_original>
